<compile_context>
chip_gen: v7x
topology: tpu7x:2x2x1
jax: 0.10.0
libtpu: 0.0.40
codegen_flags: <defaults>
</compile_context>

<pallas_src>
import math

import jax
import jax.numpy as jnp
from jax.experimental import pallas as pl
from jax.experimental.pallas import tpu as pltpu


_TARGET_TILE_BYTES = 4 * 1024 * 1024  # per pipelined VMEM buffer (per array)


def _drop_residual_kernel(scale_ref, fnout_ref, x_ref, y_ref):
    """y = fn_out * scale[b] + x   (computed in f32, cast to y dtype).

    scale_ref : SMEM (B,) f32 — 0.0 (dropped), 1/(1-prob) (kept), or 1.0 (eval).
    fnout_ref : VMEM tile of fn(x).
    x_ref     : VMEM tile of the residual input x.
    y_ref     : VMEM output tile (aliases fn_out's HBM buffer).
    """
    b = pl.program_id(0)
    s = scale_ref[b]
    y_ref[...] = (
        fnout_ref[...].astype(jnp.float32) * s + x_ref[...].astype(jnp.float32)
    ).astype(y_ref.dtype)


def _dropsample_residual(fn_out, x, scale):
    """Launch the fused drop-path-scale + residual-add kernel (lane-dense)."""
    assert fn_out.shape == x.shape and fn_out.dtype == x.dtype
    orig_shape = x.shape
    B = orig_shape[0]
    n = math.prod(orig_shape[1:])
    itemsize = jnp.dtype(x.dtype).itemsize

    # Flatten each sample and pad up to a multiple of 128 lanes so every store
    # is a full-width vst and every DMA tile is wide.  Padding (<1% traffic) is
    # sliced off after the call; padded lanes compute garbage that is discarded.
    n_pad = -(-n // 128) * 128
    fn2 = fn_out.reshape(B, n)
    x2 = x.reshape(B, n)
    if n_pad != n:
        pad = ((0, 0), (0, n_pad - n))
        fn2 = jnp.pad(fn2, pad)
        x2 = jnp.pad(x2, pad)
    r = n_pad // 128
    fn3 = fn2.reshape(B, r, 128)
    x3 = x2.reshape(B, r, 128)

    # Dtype-aware tile rows: ~4 MiB per buffer, split r into EVEN tiles and
    # round up to the sublane packing (8 f32 / 16 bf16 / 32 int8 rows).
    cap_rows = max(1, _TARGET_TILE_BYTES // (128 * itemsize))
    pack = max(8, 32 // itemsize)
    if r <= cap_rows:
        tile_r = r  # single tile per sample (block dim == full dim is legal)
    else:
        num_tiles = -(-r // cap_rows)
        tile_r = -(-r // num_tiles)
        tile_r = -(-tile_r // pack) * pack
    grid = (B, pl.cdiv(r, tile_r))

    # 3 arrays x 2 pipeline buffers + headroom.  Floor of 16 MiB keeps Mosaic's
    # internal scratch comfortable; ceiling keeps us under v7x's 64 MiB VMEM.
    tile_bytes = tile_r * 128 * itemsize
    vmem_limit = int(min(max(6 * tile_bytes + (4 << 20), 16 << 20), 48 << 20))

    smem_spec = pl.BlockSpec(memory_space=pltpu.MemorySpace.SMEM)
    data_spec = pl.BlockSpec((1, tile_r, 128), lambda b, t: (b, t, 0))

    y = pl.pallas_call(
        _drop_residual_kernel,
        out_shape=jax.ShapeDtypeStruct((B, r, 128), x.dtype),
        grid=grid,
        in_specs=[smem_spec, data_spec, data_spec],
        out_specs=data_spec,
        # fn_out is dead after this kernel — reuse its HBM buffer for the output.
        input_output_aliases={1: 0},
        compiler_params=pltpu.CompilerParams(
            dimension_semantics=("parallel", "parallel"),
            vmem_limit_bytes=vmem_limit,
        ),
        cost_estimate=pl.CostEstimate(
            flops=2 * B * n_pad,
            transcendentals=0,
            bytes_accessed=3 * B * n_pad * itemsize,
        ),
    )(scale, fn3, x3)

    if n_pad != n:
        y = y.reshape(B, n_pad)[:, :n]
    return y.reshape(orig_shape)


def mbconv_residual(x, fn, *, prob=0.0, training=True, key=None):
    """Pallas-backed MBConvResidual.forward: dropsample(fn(x)) + x.

    `fn` (the inner MBConv block) is evaluated in plain JAX; the per-sample
    drop-path scaling and the residual add are fused into one Pallas kernel.
    """
    fn_out = fn(x)
    B = x.shape[0]
    if prob == 0.0 or not training:
        scale = jnp.ones((B,), dtype=jnp.float32)
    else:
        if key is None:
            raise ValueError("a PRNG key is required when prob > 0 and training=True")
        keep = jax.random.uniform(key, (B,), dtype=jnp.float32) > prob
        scale = jnp.where(keep, 1.0 / (1.0 - prob), 0.0).astype(jnp.float32)
    return _dropsample_residual(fn_out, x, scale)


if __name__ == "__main__":
    root = jax.random.PRNGKey(0)
    k_x, k_drop, k_x2 = jax.random.split(root, 3)

    B, C, H, W = 2, 4, 16, 16
    x = jax.random.normal(k_x, (B, C, H, W), dtype=jnp.float32)

    # TODO(synk): the real inner MBConv block (`fn`) is an arbitrary user module;
    # a stand-in elementwise fn is used so the MBConvResidual-specific fused
    # drop-path + residual kernel can be exercised end to end.
    fn = jnp.tanh
    prob = 0.5

    y = jax.block_until_ready(
        mbconv_residual(x, fn, prob=prob, training=True, key=k_drop)
    )

    ok = True

    # Reference check: each sample is either x (dropped) or fn(x)/(1-p) + x (kept).
    fn_out = fn(x)
    keep = jax.random.uniform(k_drop, (B,), dtype=jnp.float32) > prob
    for b in range(B):
        expect = jnp.where(keep[b], fn_out[b] / (1.0 - prob) + x[b], x[b])
        if not jnp.allclose(y[b], expect, rtol=1e-6, atol=1e-6):
            ok = False

    # Eval / prob==0 paths reduce to a plain residual add.
    y_eval = jax.block_until_ready(mbconv_residual(x, fn, prob=prob, training=False))
    y_p0 = jax.block_until_ready(mbconv_residual(x, fn, prob=0.0, training=True))
    if not (
        jnp.allclose(y_eval, fn_out + x, rtol=1e-6, atol=1e-6)
        and jnp.allclose(y_p0, fn_out + x, rtol=1e-6, atol=1e-6)
    ):
        ok = False

    # Non-multiple-of-128 per-sample size: exercises the pad + lane-dense path.
    x_odd = jax.random.normal(k_x2, (2, 3, 5, 7), dtype=jnp.float32)
    y_odd = jax.block_until_ready(mbconv_residual(x_odd, fn, prob=0.0, training=True))
    if not jnp.allclose(y_odd, fn(x_odd) + x_odd, rtol=1e-6, atol=1e-6):
        ok = False

    if not ok:
        raise SystemExit("MBConvResidual Pallas kernel produced unexpected values")
    print("KERNEL_OK")
</pallas_src>

<mosaic_0001>
module attributes {stable_mosaic.version = 11 : i64} {
  func.func @_drop_residual_kernel(%arg0: i32, %arg1: i32, %arg2: memref<2xf32, #tpu.memory_space<smem>>, %arg3: memref<1x8x128xf32, #tpu.memory_space<vmem>>, %arg4: memref<1x8x128xf32, #tpu.memory_space<vmem>>, %arg5: memref<1x8x128xf32, #tpu.memory_space<vmem>>) attributes {dimension_semantics = [#tpu.dimension_semantics<parallel>, #tpu.dimension_semantics<parallel>], iteration_bounds = array<i64: 2, 1>, scalar_prefetch = 0 : i64, scratch_operands = 0 : i64, tpu.core_type = #tpu.core_type<tc>, window_params = [{transform_indices = @transform_0, window_bounds = array<i64: 2>}, {transform_indices = @transform_1, window_bounds = array<i64: 1, 8, 128>}, {transform_indices = @transform_2, window_bounds = array<i64: 1, 8, 128>}, {transform_indices = @transform_3, window_bounds = array<i64: 1, 8, 128>}]} {
    %0 = arith.index_cast %arg0 : i32 to index
    %1 = memref.load %arg2[%0] : memref<2xf32, #tpu.memory_space<smem>>
    %c0 = arith.constant 0 : index
    %c0_0 = arith.constant 0 : index
    %c0_1 = arith.constant 0 : index
    %2 = vector.load %arg3[%c0, %c0_0, %c0_1] : memref<1x8x128xf32, #tpu.memory_space<vmem>>, vector<1x8x128xf32>
    %3 = vector.broadcast %1 : f32 to vector<1x8x128xf32>
    %4 = arith.mulf %2, %3 : vector<1x8x128xf32>
    %c0_2 = arith.constant 0 : index
    %c0_3 = arith.constant 0 : index
    %c0_4 = arith.constant 0 : index
    %5 = vector.load %arg4[%c0_2, %c0_3, %c0_4] : memref<1x8x128xf32, #tpu.memory_space<vmem>>, vector<1x8x128xf32>
    %6 = arith.addf %4, %5 : vector<1x8x128xf32>
    %c0_5 = arith.constant 0 : index
    %c0_6 = arith.constant 0 : index
    %c0_7 = arith.constant 0 : index
    %7 = vector.load %arg5[%c0_5, %c0_6, %c0_7] : memref<1x8x128xf32, #tpu.memory_space<vmem>>, vector<1x8x128xf32>
    tpu.vector_store %arg5[%c0_5, %c0_6, %c0_7], %6 {strides = array<i32>} : memref<1x8x128xf32, #tpu.memory_space<vmem>>, vector<1x8x128xf32>,
    return
  }
  func.func @transform_0(%arg0: i32, %arg1: i32) -> i32 {
    %c0_i32 = arith.constant 0 : i32
    %c0_i32_0 = arith.constant 0 : i32
    return %c0_i32 : i32
  }
  func.func @transform_1(%arg0: i32, %arg1: i32) -> (i32, i32, i32) {
    %c0_i32 = arith.constant 0 : i32
    %c0_i32_0 = arith.constant 0 : i32
    return %arg0, %arg1, %c0_i32 : i32, i32, i32
  }
  func.func @transform_2(%arg0: i32, %arg1: i32) -> (i32, i32, i32) {
    %c0_i32 = arith.constant 0 : i32
    %c0_i32_0 = arith.constant 0 : i32
    return %arg0, %arg1, %c0_i32 : i32, i32, i32
  }
  func.func @transform_3(%arg0: i32, %arg1: i32) -> (i32, i32, i32) {
    %c0_i32 = arith.constant 0 : i32
    %c0_i32_0 = arith.constant 0 : i32
    return %arg0, %arg1, %c0_i32 : i32, i32, i32
  }
}

</mosaic_0001>

<llo_original>
// kernel: tpu_custom_call.1
$region0: #{tpu_custom_call.1}
  #allocation0 [shape = 'u32[]', space=smem, size = 0x4, offset = 0x4, fixed_abs, tag = 'smem constant byte address 0x4 - core index']
  #allocation1 [shape = 'u32[144,128]{1,0:T(1,128)}', space=vmem, size = 0x12000, scoped, tag = 'internal scratch']
  %s0 = inlined_call_operand.vmem [shape: f32[2], index: 0, kind: input, shape index: {}]
  %s1 = inlined_call_operand.hbm [shape: f32[2,8,128], index: 1, kind: input, shape index: {}, may-alias: {1,3}]
  %s2 = inlined_call_operand.vmem [shape: f32[2,8,128], index: 2, kind: input, shape index: {}]
  %s3 = inlined_call_operand.hbm [shape: f32[2,8,128], index: 3, kind: output, shape index: {}, may-alias: {1,3}]
  %s4 = sld [smem:[#allocation0]]
  $region53: #{tpu_custom_call.1} parent=0
    _
  %s6 = ssub.s32 1, %s4
  %s7 = scalar_select 0, %s6, %s4
  $region1: #{tpu_custom_call.1} parent=0
    #allocation2 [shape = 'u8[512]{0}', space=smem, size = 0x200, scoped, tag = 'input window, operand 0, single buffered']
    #allocation3 [shape = 's32[2]{0}', space=sflag, size = 0x8, scoped, tag = 'scoped memory for tpu_custom_call.1']
    #allocation4 [shape = 's32[2]{0}', space=sflag, size = 0x8, scoped, tag = 'scoped memory for tpu_custom_call.1']
    #allocation5 [shape = 's32[2]{0}', space=sflag, size = 0x8, scoped, tag = 'scoped memory for tpu_custom_call.1']
    #allocation6 [shape = 'u8[8192]{0}', space=vmem, size = 0x2000, scoped, tag = 'input window, operand 1']
    #allocation7 [shape = 'u8[8192]{0}', space=vmem, size = 0x2000, scoped, tag = 'output window, operand 0']
    %8 = vsyncpa [#allocation5], 0
    %9 = vsyncpa [#allocation3], 0
    %s10 = scalar_lea.sflag [#allocation3], 1
    %11 = vsyncpa %s10, 0
    %12 = vsyncpa [#allocation4], 0
    %s13 = scalar_lea.sflag [#allocation4], 1
    %14 = vsyncpa %s13, 0
    loop: start=0, step=1, limit=4
    $region2: #{tpu_custom_call.1} parent=1 // loop_pre_header
      _
    $region3: #{tpu_custom_call.1} parent=1 // loop_header
      %s16 = sphi 0, %s20
      %p17 = scmp.ge.s32.totalorder %s16, 4
      %s23 = sphi 0, %s35
      %s24 = sphi 0, %s31
      %s25 = sphi 0, %s23
      %s26 = sphi 0, %s24
      %s27 = sphi 0, %s25
      %s28 = sphi 0, %s26
      %s36 = sphi 0, %s36
      %s38 = sphi 0, %s36
      %s39 = sphi 0, %s38
      %s53 = sphi 0, %s39
      %s61 = sphi 0, %s63
      %s64 = sphi 0, %s61
      %s65 = sphi 0, %s64
      %s81 = sphi 0, %s65
      %s89 = sphi 0, %s91
      %s92 = sphi 0, %s89
      %s93 = sphi 0, %s92
      %s109 = sphi 0, %s93
      %s117 = sphi 0, %s119
      %s120 = sphi 0, %s117
      %s121 = sphi 0, %s120
      %s137 = sphi 0, %s121
    $region4: #{tpu_custom_call.1} parent=1 // loop_header_branch
      %19 = sbr.rel (%p17) target = $region8
    $region5: #{tpu_custom_call.1} parent=1 // loop_body
      %s21 = ssub.s32 %s16, 1
      %s22 = ssub.s32 %s16, 2
      %s29 = sadd.s32 1, %s24
      %p30 = scmp.ge.s32.totalorder %s29, 1
      %s31 = scalar_select %p30, 0, %s29
      %s32 = sadd.s32 1, %s23
      %s33 = scalar_select %p30, %s32, %s23
      %p34 = scmp.ge.s32.totalorder %s33, 2
      %s35 = scalar_select %p34, 0, %s33
      %s37 = sadd.s32 %s36, 1
      %p40 = scmp.eq.s32.totalorder %s16, 1
      %p41 = scmp.ne.s32.totalorder %s36, %s38
      %p42 = scmp.eq.s32.totalorder %s16, 0
      %p43 = por %p41, %p42
      %p44 = scmp.ne.s32.totalorder %s36, %s38
      %p45 = scmp.eq.s32.totalorder %s21, 1
      %p46 = por %p44, %p45
      %p47 = scmp.ne.s32.totalorder %s38, %s39
      %p48 = scmp.eq.s32.totalorder %s21, 0
      %p49 = por %p47, %p48
      %p50 = scmp.ne.s32.totalorder %s38, %s39
      %p51 = scmp.eq.s32.totalorder %s22, 1
      %p52 = por %p50, %p51
      %p54 = scmp.ne.s32.totalorder %s39, %s53
      %p55 = scmp.eq.s32.totalorder %s22, 0
      %p56 = por %p54, %p55
      %s57 = ssub.s32 %s23, %s35
      %s58 = ssub.s32 %s24, %s31
      %s59 = sor.u32 %s57, %s58
      %p60 = scmp.eq.s32.totalorder %s59, 0
      %s62 = sadd.s32 %s61, 1
      %s63 = scalar_select %p60, %s61, %s62
      %p66 = pneg %p60
      %p67 = scmp.eq.s32.totalorder %s16, 1
      %p68 = por %p66, %p67
      %p69 = scmp.ne.s32.totalorder %s61, %s64
      %p70 = scmp.eq.s32.totalorder %s16, 0
      %p71 = por %p69, %p70
      %p72 = scmp.ne.s32.totalorder %s61, %s64
      %p73 = scmp.eq.s32.totalorder %s21, 1
      %p74 = por %p72, %p73
      %p75 = scmp.ne.s32.totalorder %s64, %s65
      %p76 = scmp.eq.s32.totalorder %s21, 0
      %p77 = por %p75, %p76
      %p78 = scmp.ne.s32.totalorder %s64, %s65
      %p79 = scmp.eq.s32.totalorder %s22, 1
      %p80 = por %p78, %p79
      %p82 = scmp.ne.s32.totalorder %s65, %s81
      %p83 = scmp.eq.s32.totalorder %s22, 0
      %p84 = por %p82, %p83
      %s85 = ssub.s32 %s23, %s35
      %s86 = ssub.s32 %s24, %s31
      %s87 = sor.u32 %s85, %s86
      %p88 = scmp.eq.s32.totalorder %s87, 0
      %s90 = sadd.s32 %s89, 1
      %s91 = scalar_select %p88, %s89, %s90
      %p94 = pneg %p88
      %p95 = scmp.eq.s32.totalorder %s16, 1
      %p96 = por %p94, %p95
      %p97 = scmp.ne.s32.totalorder %s89, %s92
      %p98 = scmp.eq.s32.totalorder %s16, 0
      %p99 = por %p97, %p98
      %p100 = scmp.ne.s32.totalorder %s89, %s92
      %p101 = scmp.eq.s32.totalorder %s21, 1
      %p102 = por %p100, %p101
      %p103 = scmp.ne.s32.totalorder %s92, %s93
      %p104 = scmp.eq.s32.totalorder %s21, 0
      %p105 = por %p103, %p104
      %p106 = scmp.ne.s32.totalorder %s92, %s93
      %p107 = scmp.eq.s32.totalorder %s22, 1
      %p108 = por %p106, %p107
      %p110 = scmp.ne.s32.totalorder %s93, %s109
      %p111 = scmp.eq.s32.totalorder %s22, 0
      %p112 = por %p110, %p111
      %s113 = ssub.s32 %s23, %s35
      %s114 = ssub.s32 %s24, %s31
      %s115 = sor.u32 %s113, %s114
      %p116 = scmp.eq.s32.totalorder %s115, 0
      %s118 = sadd.s32 %s117, 1
      %s119 = scalar_select %p116, %s117, %s118
      %p122 = pneg %p116
      %p123 = scmp.eq.s32.totalorder %s16, 1
      %p124 = por %p122, %p123
      %p125 = scmp.ne.s32.totalorder %s117, %s120
      %p126 = scmp.eq.s32.totalorder %s16, 0
      %p127 = por %p125, %p126
      %p128 = scmp.ne.s32.totalorder %s117, %s120
      %p129 = scmp.eq.s32.totalorder %s21, 1
      %p130 = por %p128, %p129
      %p131 = scmp.ne.s32.totalorder %s120, %s121
      %p132 = scmp.eq.s32.totalorder %s21, 0
      %p133 = por %p131, %p132
      %p134 = scmp.ne.s32.totalorder %s120, %s121
      %p135 = scmp.eq.s32.totalorder %s22, 1
      %p136 = por %p134, %p135
      %p138 = scmp.ne.s32.totalorder %s121, %s137
      %p139 = scmp.eq.s32.totalorder %s22, 0
      %p140 = por %p138, %p139
      %p141 = scmp.le.s32.totalorder 1, %s16
      %p142 = scmp.lt.s32.totalorder %s16, 3
      %p143 = pnand %p141, %p142
      %p144 = pneg %p143
      // Predicated region
      $region9: #{tpu_custom_call.1} parent=5 // pred_check
        _
      $region10: #{tpu_custom_call.1} parent=5 // pred_check_branch
        %146 = sbr.rel (%p143) target = $region12
      $region11: #{tpu_custom_call.1} parent=5 // pred_region
        %s147 = ssub.s32 %s16, 1
        // Predicated region
        $region13: #{tpu_custom_call.1} parent=11 // pred_check
          %p148 = pneg %p49
        $region14: #{tpu_custom_call.1} parent=11 // pred_check_branch
          %150 = sbr.rel (%p148) target = $region16
        $region15: #{tpu_custom_call.1} parent=11 // pred_region
          %s152 = ssub.s32 16, 16
          %153 = vsyncadd [#allocation5], %s152
          %s155 = sshll.u32 %s0, 4
          %s156 = int_to_ptr.vmem [resolvable:$true] %s155
          %158 = dma.vmem_to_smem %s156, 16, [#allocation2], [#allocation5]
        $region16: #{tpu_custom_call.1} parent=11 // pred_fallthru
          _
      $region12: #{tpu_custom_call.1} parent=5 // pred_fallthru
        _
      %p159 = scmp.lt.s32.totalorder %s16, 2
      // Predicated region
      $region17: #{tpu_custom_call.1} parent=5 // pred_check
        %p160 = pneg %p159
      $region18: #{tpu_custom_call.1} parent=5 // pred_check_branch
        %162 = sbr.rel (%p160) target = $region20
      $region19: #{tpu_custom_call.1} parent=5 // pred_region
        // Predicated region
        $region21: #{tpu_custom_call.1} parent=19 // pred_check
          %p163 = pneg %p71
        $region22: #{tpu_custom_call.1} parent=19 // pred_check_branch
          %165 = sbr.rel (%p163) target = $region24
        $region23: #{tpu_custom_call.1} parent=19 // pred_region
          %s166 = sand.u32 %s61, 1
          %s167 = scalar_lea.sflag [#allocation3], %s166
          %s168 = sand.u32 %s61, 1
          %s169 = smul.addr %s168, 8
          %s170 = scalar_lea.vmem [#allocation6], %s169
          %s172 = ssub.s32 128, 128
          %173 = vsyncadd %s167, %s172
          %s174 = sadd.s32 %s24, %s23
          %s175 = smul.addr %s174, 128
          %s176 = scalar_lea.hbm %s1, %s175
          %s178 = sshll.u32 %s170, 4
          %s179 = int_to_ptr.vmem [resolvable:$true] %s178
          %181 = dma.hbm_to_vmem [thread:$0]  %s176, 128, %s179, %s167
        $region24: #{tpu_custom_call.1} parent=19 // pred_fallthru
          _
        // Predicated region
        $region25: #{tpu_custom_call.1} parent=19 // pred_check
          %p182 = pneg %p99
        $region26: #{tpu_custom_call.1} parent=19 // pred_check_branch
          %184 = sbr.rel (%p182) target = $region28
        $region27: #{tpu_custom_call.1} parent=19 // pred_region
          %p185 = scmp.lt.s32.totalorder %s23, 1
          %s186 = scalar_select %p185, %s23, 1
          %p187 = scmp.lt.s32.totalorder %s24, 0
          %s188 = scalar_select %p187, %s24, 0
          %s189 = sadd.s32 %s188, %s186
          %s190 = smul.addr %s189, 8
          %s191 = scalar_lea.vmem %s2, %s190
        $region28: #{tpu_custom_call.1} parent=19 // pred_fallthru
          _
      $region20: #{tpu_custom_call.1} parent=5 // pred_fallthru
        _
      %p192 = scmp.le.s32.totalorder 1, %s16
      %p193 = scmp.lt.s32.totalorder %s16, 3
      %p194 = pnand %p192, %p193
      %p195 = pneg %p194
      // Predicated region
      $region29: #{tpu_custom_call.1} parent=5 // pred_check
        _
      $region30: #{tpu_custom_call.1} parent=5 // pred_check_branch
        %197 = sbr.rel (%p194) target = $region32
      $region31: #{tpu_custom_call.1} parent=5 // pred_region
        %s198 = ssub.s32 %s16, 1
        // Predicated region
        $region33: #{tpu_custom_call.1} parent=31 // pred_check
          %p199 = pneg %p49
        $region34: #{tpu_custom_call.1} parent=31 // pred_check_branch
          %201 = sbr.rel (%p199) target = $region36
        $region35: #{tpu_custom_call.1} parent=31 // pred_region
          %202 = dma.done [#allocation5], 16
        $region36: #{tpu_custom_call.1} parent=31 // pred_fallthru
          _
        %s203 = sand.u32 %s64, 1
        %s204 = scalar_lea.sflag [#allocation3], %s203
        %s205 = sand.u32 %s64, 1
        %s206 = smul.addr %s205, 8
        %s207 = scalar_lea.vmem [#allocation6], %s206
        // Predicated region
        $region37: #{tpu_custom_call.1} parent=31 // pred_check
          %p208 = pneg %p77
        $region38: #{tpu_custom_call.1} parent=31 // pred_check_branch
          %210 = sbr.rel (%p208) target = $region40
        $region39: #{tpu_custom_call.1} parent=31 // pred_region
          %211 = dma.done %s204, 128
        $region40: #{tpu_custom_call.1} parent=31 // pred_fallthru
          _
        %212 = sfence
        %p213 = pneg %p49
        %p214 = pneg %p46
        %s215 = sand.u32 %s64, 1
        %s216 = scalar_lea.sflag [#allocation3], %s215
        %s217 = sand.u32 %s64, 1
        %s218 = smul.addr %s217, 8
        %s219 = scalar_lea.vmem [#allocation6], %s218
        %p220 = pneg %p77
        %p221 = pneg %p74
        %p222 = scmp.lt.s32.totalorder %s25, 1
        %s223 = scalar_select %p222, %s25, 1
        %p224 = scmp.lt.s32.totalorder %s26, 0
        %s225 = scalar_select %p224, %s26, 0
        %s226 = sadd.s32 %s225, %s223
        %s227 = smul.addr %s226, 8
        %s228 = scalar_lea.vmem %s2, %s227
        %p229 = pneg %p105
        %p230 = pneg %p102
        %p231 = pneg %p133
        %p232 = pneg %p130
        %s233 = sand.u32 %s120, 1
        %s234 = scalar_lea.sflag [#allocation4], %s233
        %s235 = sand.u32 %s120, 1
        %s236 = smul.addr %s235, 8
        %s237 = scalar_lea.vmem [#allocation7], %s236
        %p238 = scmp.lt.s32.totalorder %s25, 1
        %s239 = scalar_select %p238, %s25, 1
        %p240 = scmp.lt.s32.totalorder %s26, 0
        %s241 = scalar_select %p240, %s26, 0
        %s242 = sadd.s32 %s241, %s239
        %s243 = smul.addr %s242, 8
        %s244 = scalar_lea.vmem %s2, %s243
        %s245 = sld [smem:[#allocation2 + %s25]]
        %v246 = vld [vmem:[%s207] sm:$0xff]
        %v247 = vstv %s245
        %v248 = vmul.f32 %v246, %v247
        %v249 = vld [vmem:[%s244] sm:$0xff]
        %v250 = vadd.f32 %v248, %v249
        %251 = vst [vmem:[%s237] sm:$0xff] %v250
        %s252 = sand.u32 %s120, 1
        %s253 = scalar_lea.sflag [#allocation4], %s252
        %s254 = sand.u32 %s120, 1
        %s255 = smul.addr %s254, 8
        %s256 = scalar_lea.vmem [#allocation7], %s255
        // Predicated region
        $region41: #{tpu_custom_call.1} parent=31 // pred_check
          %p257 = pneg %p130
        $region42: #{tpu_custom_call.1} parent=31 // pred_check_branch
          %259 = sbr.rel (%p257) target = $region44
        $region43: #{tpu_custom_call.1} parent=31 // pred_region
          %s261 = ssub.s32 128, 128
          %262 = vsyncadd %s253, %s261
          %s263 = sadd.s32 %s26, %s25
          %s264 = smul.addr %s263, 128
          %s265 = scalar_lea.hbm %s3, %s264
          %s267 = sshll.u32 %s256, 4
          %s268 = int_to_ptr.vmem [resolvable:$true] %s267
          %270 = dma.vmem_to_hbm [thread:$0]  %s268, 128, %s265, %s253
        $region44: #{tpu_custom_call.1} parent=31 // pred_fallthru
          _
      $region32: #{tpu_custom_call.1} parent=5 // pred_fallthru
        _
      %p271 = scmp.le.s32.totalorder 2, %s16
      // Predicated region
      $region45: #{tpu_custom_call.1} parent=5 // pred_check
        %p272 = pneg %p271
      $region46: #{tpu_custom_call.1} parent=5 // pred_check_branch
        %274 = sbr.rel (%p272) target = $region48
      $region47: #{tpu_custom_call.1} parent=5 // pred_region
        %s275 = ssub.s32 %s16, 2
        // Predicated region
        $region49: #{tpu_custom_call.1} parent=47 // pred_check
          %p276 = pneg %p136
        $region50: #{tpu_custom_call.1} parent=47 // pred_check_branch
          %278 = sbr.rel (%p276) target = $region52
        $region51: #{tpu_custom_call.1} parent=47 // pred_region
          %s279 = sand.u32 %s121, 1
          %s280 = scalar_lea.sflag [#allocation4], %s279
          %s281 = sand.u32 %s121, 1
          %s282 = smul.addr %s281, 8
          %s283 = scalar_lea.vmem [#allocation7], %s282
          %284 = dma.done %s280, 128
        $region52: #{tpu_custom_call.1} parent=47 // pred_fallthru
          _
      $region48: #{tpu_custom_call.1} parent=5 // pred_fallthru
        _
    $region6: #{tpu_custom_call.1} parent=1 // loop_footer
      %s20 = sadd.s32 1, %s16
    $region7: #{tpu_custom_call.1} parent=1 // loop_footer_branch
      %15 = sbr.rel target = $region3
    $region8: #{tpu_custom_call.1} parent=1 // loop_exit
      _
    %285 = vsyncpa [#allocation3], 1
    %s286 = scalar_lea.sflag [#allocation3], 1
    %287 = vsyncpa %s286, 1
    %288 = vsyncpa [#allocation4], 1
    %s289 = scalar_lea.sflag [#allocation4], 1
    %290 = vsyncpa %s289, 1
    %291 = vsyncpa [#allocation5], 1
    %s292 = scalar_lea.sflag [#allocation5], 1
    %293 = vsyncpa %s292, 1

</llo_original>
